<compile_context>
chip_gen: v6e
topology: v6e:2x2x1
jax: 0.10.0
libtpu: 0.0.40
codegen_flags: <defaults>
</compile_context>

<pallas_src>
import functools

import jax
import jax.numpy as jnp
import numpy as np
from jax.experimental import pallas as pl
from jax.experimental.pallas import tpu as pltpu

LAMBDA_GP = 10.0      # λ
DRIFT = 0.001         # self.drift
LRELU_SLOPE = 0.2     # leaky-relu slope of the synthetic critic


def _wloss_gp_kernel(pred_real_ref, pred_fake_ref, alpha_ref, eps_ref,
                     b1_ref, w2_ref, gram_ref,
                     real_ref, fake_ref, w1_ref,
                     o_ref, h_acc_ref, *, batch):
    """One F-tile per grid step; the critic pre-activation is accumulated.

    SMEM : pred_real (B,), pred_fake (B,), alpha (1,)           scalar bookkeeping
    VMEM (resident) : eps (BP,1) f32, b1/w2 (1,H) f32, gram (H,H) f32
    VMEM (F-tiled)  : real/fake (BP,TILE_F) bf16, w1 (TILE_F,H) bf16
    out  : (1,1) f32 loss in SMEM
    scratch : h_acc (BP,H) f32  -- running sum of x @ W1 over F tiles
    """
    t = pl.program_id(0)

    @pl.when(t == 0)
    def _init():
        h_acc_ref[...] = jnp.zeros_like(h_acc_ref)

    # Interpolated image tile: real*eps + fake*(1-eps).  Elementwise math in
    # f32 (v5e has no bf16 VPU); cast to bf16 only for the MXU operands.
    eps = eps_ref[...]                                              # (BP, 1)
    x = (real_ref[...].astype(jnp.float32) * eps
         + fake_ref[...].astype(jnp.float32) * (1.0 - eps))         # (BP, TILE_F)
    h_acc_ref[...] += jnp.dot(x.astype(jnp.bfloat16), w1_ref[...],
                              preferred_element_type=jnp.float32)   # (BP, H)

    @pl.when(t == pl.num_programs(0) - 1)
    def _finalize():
        alpha = alpha_ref[0]

        # Analytic gradient of sum(score) w.r.t. x:
        #   grad = alpha * (lrelu'(h) * w2) @ W1^T
        # so  ||grad||^2 = alpha^2 * dh (W1^T W1) dh^T   (Gram trick).
        h = alpha * h_acc_ref[...] + b1_ref[...]                    # (BP, H)
        dh = jnp.where(h > 0.0, 1.0, LRELU_SLOPE) * w2_ref[...]     # (BP, H)
        dh_g = jnp.dot(dh, gram_ref[...],
                       preferred_element_type=jnp.float32)          # (BP, H)
        grad_sq = (alpha * alpha) * jnp.sum(dh_g * dh, axis=1,
                                            keepdims=True)          # (BP, 1)
        gnorm = jnp.sqrt(grad_sq)

        # Mask the batch-padding rows out of the penalty mean.
        row = jax.lax.broadcasted_iota(jnp.int32, gnorm.shape, 0)
        pen = jnp.where(row < batch, (gnorm - 1.0) ** 2, 0.0)
        inv_b = 1.0 / float(batch)
        penalty = jnp.sum(pen) * inv_b

        # Wasserstein + drift terms from SMEM scalars (batch is small & static).
        s_real = 0.0
        s_fake = 0.0
        s_real2 = 0.0
        for i in range(batch):
            pr = pred_real_ref[i]
            pf = pred_fake_ref[i]
            s_real = s_real + pr
            s_fake = s_fake + pf
            s_real2 = s_real2 + pr * pr
        loss_w = (s_fake - s_real) * inv_b
        drift = s_real2 * inv_b

        o_ref[0, 0] = loss_w + LAMBDA_GP * penalty + DRIFT * drift


def wloss_gp_critic(pred_real, pred_fake, real, fake, eps, w1, b1, w2, alpha,
                    train_step=None, tile_f=512):
    """JAX glue: flatten NCHW, pad to TPU-friendly shapes, call the kernel.

    tile_f: F-tile size.  Tune per generation (v6e: as large as the raised
    VMEM limit allows; v7x: keep double-buffered tiles well under 32 MiB of
    its 64 MiB VMEM; v5e: target the 16 MiB scoped default).
    """
    # TODO(synk): train_step (ProGAN resolution selector) is unused by the
    #             synthetic critic.
    B = real.shape[0]
    F = int(np.prod(real.shape[1:]))
    HID = w1.shape[1]

    # Pad batch to the f32 sublane minimum (8) and features to a multiple of
    # the tile (lane-multiple of 128 for real/fake, sublane-multiple of 8 for
    # w1).  Zero padding is exact: padded rows/cols contribute nothing to h or
    # the Gram matrix, and padded batch rows are masked out of the penalty.
    BP = ((B + 7) // 8) * 8
    TILE_F = int(tile_f)
    FP = ((F + TILE_F - 1) // TILE_F) * TILE_F
    NF = FP // TILE_F

    def pad2(a, rows, cols):
        return jnp.pad(a, ((0, rows - a.shape[0]), (0, cols - a.shape[1])))

    # bf16 for the three large HBM streams; everything small stays f32.
    real_p = pad2(real.reshape(B, F), BP, FP).astype(jnp.bfloat16)
    fake_p = pad2(fake.reshape(B, F), BP, FP).astype(jnp.bfloat16)
    w1_bf = w1.astype(jnp.bfloat16)
    w1_p = pad2(w1_bf, FP, HID)

    # Tiny H x H Gram matrix, computed once per call (replaces the (B,H)x(H,F)
    # matmul, the (B,F) gradient tensor and the F-wide reduction in-kernel).
    gram = jax.lax.dot_general(w1_bf, w1_bf,
                               dimension_numbers=(((0,), (0,)), ((), ())),
                               preferred_element_type=jnp.float32)  # (H, H)

    eps_p = pad2(eps.reshape(B, 1).astype(jnp.float32), BP, 1)
    b1_f = b1.reshape(1, HID).astype(jnp.float32)
    w2_f = w2.reshape(1, HID).astype(jnp.float32)
    pr_f = pred_real.reshape(B).astype(jnp.float32)
    pf_f = pred_fake.reshape(B).astype(jnp.float32)
    alpha_arr = jnp.asarray(alpha, jnp.float32).reshape(1)

    smem = pl.BlockSpec(memory_space=pltpu.MemorySpace.SMEM)
    grid_spec = pltpu.PrefetchScalarGridSpec(
        num_scalar_prefetch=0,
        grid=(NF,),
        in_specs=[
            smem,                                            # pred_real (B,)
            smem,                                            # pred_fake (B,)
            smem,                                            # alpha (1,)
            pl.BlockSpec((BP, 1), lambda t: (0, 0)),         # eps (resident)
            pl.BlockSpec((1, HID), lambda t: (0, 0)),        # b1 (resident)
            pl.BlockSpec((1, HID), lambda t: (0, 0)),        # w2 (resident)
            pl.BlockSpec((HID, HID), lambda t: (0, 0)),      # gram (resident)
            pl.BlockSpec((BP, TILE_F), lambda t: (0, t)),    # real (F-tiled)
            pl.BlockSpec((BP, TILE_F), lambda t: (0, t)),    # fake (F-tiled)
            pl.BlockSpec((TILE_F, HID), lambda t: (t, 0)),   # w1   (F-tiled)
        ],
        out_specs=pl.BlockSpec(memory_space=pltpu.MemorySpace.SMEM),
        scratch_shapes=[pltpu.VMEM((BP, HID), jnp.float32)],
    )

    # TODO(synk): on v7x, split F into two 'parallel' halves (partial h sums
    #             reduced in the wrapper) to use the second TensorCore.
    out = pl.pallas_call(
        functools.partial(_wloss_gp_kernel, batch=B),
        out_shape=jax.ShapeDtypeStruct((1, 1), jnp.float32),
        grid_spec=grid_spec,
        compiler_params=pltpu.CompilerParams(
            dimension_semantics=("arbitrary",),   # F axis is a reduction
            vmem_limit_bytes=32 * 1024 * 1024),
    )(pr_f, pf_f, alpha_arr, eps_p, b1_f, w2_f, gram, real_p, fake_p, w1_p)
    return out[0, 0]


if __name__ == "__main__":
    key = jax.random.PRNGKey(0)
    kreal, kfake, kpr, kpf, keps, kw1, kb1, kw2 = jax.random.split(key, 8)

    # Small shapes consistent with the module's forward.
    B, C, H, W = 2, 4, 16, 16
    F = C * H * W          # 1024
    HID = 32               # synthetic critic hidden width

    real = jax.random.normal(kreal, (B, C, H, W), jnp.float32)
    fake = jax.random.normal(kfake, (B, C, H, W), jnp.float32)
    pred_real = jax.random.normal(kpr, (B, 1), jnp.float32)
    pred_fake = jax.random.normal(kpf, (B, 1), jnp.float32)
    # ε ~ N(0,1) per sample (module uses torch.randn)
    eps = jax.random.normal(keps, (B, 1), jnp.float32)

    # Deterministic synthetic critic parameters.
    w1 = jax.random.normal(kw1, (F, HID), jnp.float32) / jnp.sqrt(F)
    b1 = jax.random.normal(kb1, (1, HID), jnp.float32) * 0.1
    w2 = jax.random.normal(kw2, (1, HID), jnp.float32) / jnp.sqrt(HID)

    alpha = 0.7
    train_step = 3  # unused by the synthetic critic (see TODO above)

    loss = wloss_gp_critic(pred_real, pred_fake, real, fake, eps,
                           w1, b1, w2, alpha, train_step)
    loss = jax.block_until_ready(loss)

    # Pure-JAX reference (jax.grad, like torch.autograd.grad).  The big
    # streams are quantized to bf16 exactly as the kernel does, so the check
    # validates the kernel math rather than quantization noise.
    f32 = jnp.float32
    real_q = real.reshape(B, F).astype(jnp.bfloat16).astype(f32)
    fake_q = fake.reshape(B, F).astype(jnp.bfloat16).astype(f32)
    w1_q = w1.astype(jnp.bfloat16).astype(f32)
    x_q = (real_q * eps + fake_q * (1.0 - eps)).astype(jnp.bfloat16).astype(f32)

    def critic_ref(x):
        hpre = alpha * (x @ w1_q) + b1
        act = jnp.where(hpre > 0, hpre, LRELU_SLOPE * hpre)
        return act @ w2.T                                   # (B, 1)

    g_ref = jax.grad(lambda x: jnp.sum(critic_ref(x)))(x_q)
    gnorm_ref = jnp.sqrt(jnp.sum(g_ref * g_ref, axis=1))
    ref = (jnp.mean(pred_fake) - jnp.mean(pred_real)
           + LAMBDA_GP * jnp.mean((gnorm_ref - 1.0) ** 2)
           + DRIFT * jnp.mean(pred_real ** 2))

    np.testing.assert_allclose(np.asarray(loss), np.asarray(ref),
                               rtol=1e-2, atol=1e-2)
    print("KERNEL_OK")
</pallas_src>

<mosaic_0001>
module attributes {stable_mosaic.version = 11 : i64} {
  func.func @_wloss_gp_kernel(%arg0: i32, %arg1: memref<2xf32, #tpu.memory_space<smem>>, %arg2: memref<2xf32, #tpu.memory_space<smem>>, %arg3: memref<1xf32, #tpu.memory_space<smem>>, %arg4: memref<8x1xf32, #tpu.memory_space<vmem>>, %arg5: memref<1x32xf32, #tpu.memory_space<vmem>>, %arg6: memref<1x32xf32, #tpu.memory_space<vmem>>, %arg7: memref<32x32xf32, #tpu.memory_space<vmem>>, %arg8: memref<8x512xbf16, #tpu.memory_space<vmem>>, %arg9: memref<8x512xbf16, #tpu.memory_space<vmem>>, %arg10: memref<512x32xbf16, #tpu.memory_space<vmem>>, %arg11: memref<1x1xf32, #tpu.memory_space<smem>>, %arg12: memref<8x32xf32, #tpu.memory_space<vmem>>) attributes {dimension_semantics = [#tpu.dimension_semantics<arbitrary>], iteration_bounds = array<i64: 2>, scalar_prefetch = 0 : i64, scratch_operands = 1 : i64, tpu.core_type = #tpu.core_type<tc>, window_params = [{transform_indices = @transform_0, window_bounds = array<i64: 2>}, {transform_indices = @transform_1, window_bounds = array<i64: 2>}, {transform_indices = @transform_2, window_bounds = array<i64: 1>}, {pipeline_mode = #tpu.pipeline_mode<synchronous>, transform_indices = @transform_3, window_bounds = array<i64: 8, 1>}, {pipeline_mode = #tpu.pipeline_mode<synchronous>, transform_indices = @transform_4, window_bounds = array<i64: 1, 32>}, {pipeline_mode = #tpu.pipeline_mode<synchronous>, transform_indices = @transform_5, window_bounds = array<i64: 1, 32>}, {pipeline_mode = #tpu.pipeline_mode<synchronous>, transform_indices = @transform_6, window_bounds = array<i64: 32, 32>}, {transform_indices = @transform_7, window_bounds = array<i64: 8, 512>}, {transform_indices = @transform_8, window_bounds = array<i64: 8, 512>}, {transform_indices = @transform_9, window_bounds = array<i64: 512, 32>}, {transform_indices = @transform_10, window_bounds = array<i64: 1, 1>}]} {
    %c0_i32 = arith.constant 0 : i32
    %0 = arith.cmpi eq, %arg0, %c0_i32 : i32
    %1 = arith.extui %0 : i1 to i32
    %c0_i32_0 = arith.constant 0 : i32
    %2 = arith.cmpi ne, %1, %c0_i32_0 : i32
    scf.if %2 {
      %cst_14 = arith.constant 0.000000e+00 : f32
      %24 = vector.broadcast %cst_14 : f32 to vector<8x32xf32>
      %c0_15 = arith.constant 0 : index
      %c0_16 = arith.constant 0 : index
      %25 = vector.load %arg12[%c0_15, %c0_16] : memref<8x32xf32, #tpu.memory_space<vmem>>, vector<8x32xf32>
      tpu.vector_store %arg12[%c0_15, %c0_16], %24 {strides = array<i32>} : memref<8x32xf32, #tpu.memory_space<vmem>>, vector<8x32xf32>,
    } else {
    }
    %c0 = arith.constant 0 : index
    %c0_1 = arith.constant 0 : index
    %3 = vector.load %arg4[%c0, %c0_1] : memref<8x1xf32, #tpu.memory_space<vmem>>, vector<8x1xf32>
    %c0_2 = arith.constant 0 : index
    %c0_3 = arith.constant 0 : index
    %4 = vector.load %arg8[%c0_2, %c0_3] : memref<8x512xbf16, #tpu.memory_space<vmem>>, vector<8x512xbf16>
    %5 = arith.extf %4 : vector<8x512xbf16> to vector<8x512xf32>
    %6 = vector.broadcast %3 : vector<8x1xf32> to vector<8x512xf32>
    %7 = arith.mulf %5, %6 : vector<8x512xf32>
    %c0_4 = arith.constant 0 : index
    %c0_5 = arith.constant 0 : index
    %8 = vector.load %arg9[%c0_4, %c0_5] : memref<8x512xbf16, #tpu.memory_space<vmem>>, vector<8x512xbf16>
    %9 = arith.extf %8 : vector<8x512xbf16> to vector<8x512xf32>
    %cst = arith.constant 1.000000e+00 : f32
    %10 = vector.broadcast %cst : f32 to vector<8x1xf32>
    %11 = arith.subf %10, %3 : vector<8x1xf32>
    %12 = vector.broadcast %11 : vector<8x1xf32> to vector<8x512xf32>
    %13 = arith.mulf %9, %12 : vector<8x512xf32>
    %14 = arith.addf %7, %13 : vector<8x512xf32>
    %c0_6 = arith.constant 0 : index
    %c0_7 = arith.constant 0 : index
    %15 = vector.load %arg12[%c0_6, %c0_7] : memref<8x32xf32, #tpu.memory_space<vmem>>, vector<8x32xf32>
    %16 = arith.truncf %14 : vector<8x512xf32> to vector<8x512xbf16>
    %c0_8 = arith.constant 0 : index
    %c0_9 = arith.constant 0 : index
    %17 = vector.load %arg10[%c0_8, %c0_9] : memref<512x32xbf16, #tpu.memory_space<vmem>>, vector<512x32xbf16>
    %cst_10 = arith.constant dense<0.000000e+00> : vector<8x32xf32>
    %18 = tpu.matmul %16, %17, %cst_10 {dimension_numbers = #tpu.dot_dimension_numbers<[1], [0], [0], [1], [0, 0, 1, 1], [], []>} : vector<8x512xbf16>, vector<512x32xbf16>, vector<8x32xf32> -> vector<8x32xf32>
    %19 = arith.addf %15, %18 : vector<8x32xf32>
    %c0_11 = arith.constant 0 : index
    %c0_12 = arith.constant 0 : index
    %20 = vector.load %arg12[%c0_11, %c0_12] : memref<8x32xf32, #tpu.memory_space<vmem>>, vector<8x32xf32>
    tpu.vector_store %arg12[%c0_11, %c0_12], %19 {strides = array<i32>} : memref<8x32xf32, #tpu.memory_space<vmem>>, vector<8x32xf32>,
    %c1_i32 = arith.constant 1 : i32
    %21 = arith.cmpi eq, %arg0, %c1_i32 : i32
    %22 = arith.extui %21 : i1 to i32
    %c0_i32_13 = arith.constant 0 : i32
    %23 = arith.cmpi ne, %22, %c0_i32_13 : i32
    scf.if %23 {
      %c0_14 = arith.constant 0 : index
      %24 = memref.load %arg3[%c0_14] : memref<1xf32, #tpu.memory_space<smem>>
      %c0_15 = arith.constant 0 : index
      %c0_16 = arith.constant 0 : index
      %25 = vector.load %arg12[%c0_15, %c0_16] : memref<8x32xf32, #tpu.memory_space<vmem>>, vector<8x32xf32>
      %26 = vector.broadcast %24 : f32 to vector<8x32xf32>
      %27 = arith.mulf %26, %25 : vector<8x32xf32>
      %c0_17 = arith.constant 0 : index
      %c0_18 = arith.constant 0 : index
      %28 = vector.load %arg5[%c0_17, %c0_18] : memref<1x32xf32, #tpu.memory_space<vmem>>, vector<1x32xf32>
      %29 = vector.broadcast %28 : vector<1x32xf32> to vector<8x32xf32>
      %30 = arith.addf %27, %29 : vector<8x32xf32>
      %cst_19 = arith.constant 0.000000e+00 : f32
      %31 = vector.broadcast %cst_19 : f32 to vector<8x32xf32>
      %32 = arith.cmpf ogt, %30, %31 : vector<8x32xf32>
      %cst_20 = arith.constant 1.000000e+00 : f32
      %cst_21 = arith.constant 2.000000e-01 : f32
      %33 = vector.broadcast %cst_20 : f32 to vector<8x32xf32>
      %34 = vector.broadcast %cst_21 : f32 to vector<8x32xf32>
      %35 = arith.select %32, %33, %34 : vector<8x32xi1>, vector<8x32xf32>
      %c0_22 = arith.constant 0 : index
      %c0_23 = arith.constant 0 : index
      %36 = vector.load %arg6[%c0_22, %c0_23] : memref<1x32xf32, #tpu.memory_space<vmem>>, vector<1x32xf32>
      %37 = vector.broadcast %36 : vector<1x32xf32> to vector<8x32xf32>
      %38 = arith.mulf %35, %37 : vector<8x32xf32>
      %c0_24 = arith.constant 0 : index
      %c0_25 = arith.constant 0 : index
      %39 = vector.load %arg7[%c0_24, %c0_25] : memref<32x32xf32, #tpu.memory_space<vmem>>, vector<32x32xf32>
      %cst_26 = arith.constant dense<0.000000e+00> : vector<8x32xf32>
      %40 = tpu.matmul %38, %39, %cst_26 {dimension_numbers = #tpu.dot_dimension_numbers<[1], [0], [0], [1], [0, 0, 1, 1], [], []>} : vector<8x32xf32>, vector<32x32xf32>, vector<8x32xf32> -> vector<8x32xf32>
      %41 = arith.mulf %24, %24 : f32
      %42 = arith.mulf %40, %38 : vector<8x32xf32>
      %cst_27 = arith.constant dense<0.000000e+00> : vector<8xf32>
      %43 = vector.multi_reduction <add>, %42, %cst_27 [1] : vector<8x32xf32> to vector<8xf32>
      %44 = vector.shape_cast %43 : vector<8xf32> to vector<8x1xf32>
      %45 = vector.broadcast %41 : f32 to vector<8x1xf32>
      %46 = arith.mulf %45, %44 : vector<8x1xf32>
      %47 = math.sqrt %46 : vector<8x1xf32>
      %48 = tpu.iota {dimensions = array<i32: 0>} : vector<8x1xi32>
      %c2_i32 = arith.constant 2 : i32
      %49 = vector.broadcast %c2_i32 : i32 to vector<8x1xi32>
      %50 = arith.cmpi slt, %48, %49 : vector<8x1xi32>
      %cst_28 = arith.constant 1.000000e+00 : f32
      %51 = vector.broadcast %cst_28 : f32 to vector<8x1xf32>
      %52 = arith.subf %47, %51 : vector<8x1xf32>
      %53 = arith.mulf %52, %52 : vector<8x1xf32>
      %cst_29 = arith.constant 0.000000e+00 : f32
      %54 = vector.broadcast %cst_29 : f32 to vector<8x1xf32>
      %55 = arith.select %50, %53, %54 : vector<8x1xi1>, vector<8x1xf32>
      %56 = vector.shape_cast %55 : vector<8x1xf32> to vector<1x8x1xf32>
      %cst_30 = arith.constant dense<0.000000e+00> : vector<1xf32>
      %57 = vector.multi_reduction <add>, %56, %cst_30 [1, 2] : vector<1x8x1xf32> to vector<1xf32>
      %58 = vector.shape_cast %57 : vector<1xf32> to vector<1x1x1xf32>
      %59 = vector.extract %58[0, 0, 0] : f32 from vector<1x1x1xf32>
      %cst_31 = arith.constant 5.000000e-01 : f32
      %60 = arith.mulf %59, %cst_31 : f32
      %c0_32 = arith.constant 0 : index
      %61 = memref.load %arg1[%c0_32] : memref<2xf32, #tpu.memory_space<smem>>
      %c0_33 = arith.constant 0 : index
      %62 = memref.load %arg2[%c0_33] : memref<2xf32, #tpu.memory_space<smem>>
      %cst_34 = arith.constant 0.000000e+00 : f32
      %63 = arith.addf %cst_34, %61 : f32
      %cst_35 = arith.constant 0.000000e+00 : f32
      %64 = arith.addf %cst_35, %62 : f32
      %65 = arith.mulf %61, %61 : f32
      %cst_36 = arith.constant 0.000000e+00 : f32
      %66 = arith.addf %cst_36, %65 : f32
      %c1 = arith.constant 1 : index
      %67 = memref.load %arg1[%c1] : memref<2xf32, #tpu.memory_space<smem>>
      %c1_37 = arith.constant 1 : index
      %68 = memref.load %arg2[%c1_37] : memref<2xf32, #tpu.memory_space<smem>>
      %69 = arith.addf %63, %67 : f32
      %70 = arith.addf %64, %68 : f32
      %71 = arith.mulf %67, %67 : f32
      %72 = arith.addf %66, %71 : f32
      %73 = arith.subf %70, %69 : f32
      %cst_38 = arith.constant 5.000000e-01 : f32
      %74 = arith.mulf %73, %cst_38 : f32
      %cst_39 = arith.constant 5.000000e-01 : f32
      %75 = arith.mulf %72, %cst_39 : f32
      %cst_40 = arith.constant 1.000000e+01 : f32
      %76 = arith.mulf %cst_40, %60 : f32
      %77 = arith.addf %74, %76 : f32
      %cst_41 = arith.constant 1.000000e-03 : f32
      %78 = arith.mulf %cst_41, %75 : f32
      %79 = arith.addf %77, %78 : f32
      %c0_42 = arith.constant 0 : index
      %c0_43 = arith.constant 0 : index
      %80 = memref.load %arg11[%c0_42, %c0_43] : memref<1x1xf32, #tpu.memory_space<smem>>
      memref.store %79, %arg11[%c0_42, %c0_43] : memref<1x1xf32, #tpu.memory_space<smem>>
    } else {
    }
    return
  }
  func.func @transform_0(%arg0: i32) -> i32 {
    %c0_i32 = arith.constant 0 : i32
    %c0_i32_0 = arith.constant 0 : i32
    return %c0_i32 : i32
  }
  func.func @transform_1(%arg0: i32) -> i32 {
    %c0_i32 = arith.constant 0 : i32
    %c0_i32_0 = arith.constant 0 : i32
    return %c0_i32 : i32
  }
  func.func @transform_2(%arg0: i32) -> i32 {
    %c0_i32 = arith.constant 0 : i32
    %c0_i32_0 = arith.constant 0 : i32
    return %c0_i32 : i32
  }
  func.func @transform_3(%arg0: i32) -> (i32, i32) {
    %c0_i32 = arith.constant 0 : i32
    %c0_i32_0 = arith.constant 0 : i32
    %c0_i32_1 = arith.constant 0 : i32
    return %c0_i32, %c0_i32_0 : i32, i32
  }
  func.func @transform_4(%arg0: i32) -> (i32, i32) {
    %c0_i32 = arith.constant 0 : i32
    %c0_i32_0 = arith.constant 0 : i32
    %c0_i32_1 = arith.constant 0 : i32
    return %c0_i32, %c0_i32_0 : i32, i32
  }
  func.func @transform_5(%arg0: i32) -> (i32, i32) {
    %c0_i32 = arith.constant 0 : i32
    %c0_i32_0 = arith.constant 0 : i32
    %c0_i32_1 = arith.constant 0 : i32
    return %c0_i32, %c0_i32_0 : i32, i32
  }
  func.func @transform_6(%arg0: i32) -> (i32, i32) {
    %c0_i32 = arith.constant 0 : i32
    %c0_i32_0 = arith.constant 0 : i32
    %c0_i32_1 = arith.constant 0 : i32
    return %c0_i32, %c0_i32_0 : i32, i32
  }
  func.func @transform_7(%arg0: i32) -> (i32, i32) {
    %c0_i32 = arith.constant 0 : i32
    %c0_i32_0 = arith.constant 0 : i32
    return %c0_i32, %arg0 : i32, i32
  }
  func.func @transform_8(%arg0: i32) -> (i32, i32) {
    %c0_i32 = arith.constant 0 : i32
    %c0_i32_0 = arith.constant 0 : i32
    return %c0_i32, %arg0 : i32, i32
  }
  func.func @transform_9(%arg0: i32) -> (i32, i32) {
    %c0_i32 = arith.constant 0 : i32
    %c0_i32_0 = arith.constant 0 : i32
    return %arg0, %c0_i32 : i32, i32
  }
  func.func @transform_10(%arg0: i32) -> (i32, i32) {
    %c0_i32 = arith.constant 0 : i32
    %c0_i32_0 = arith.constant 0 : i32
    %c0_i32_1 = arith.constant 0 : i32
    return %c0_i32, %c0_i32_0 : i32, i32
  }
}

</mosaic_0001>

<llo_original>
// kernel: tpu_custom_call.1
$region0: #{tpu_custom_call.1}
  #allocation0 [shape = 'u32[]', space=smem, size = 0x4, offset = 0x4, fixed_abs, tag = 'smem constant byte address 0x4 - core index']
  #allocation1 [shape = 'u32[144,128]{1,0:T(1,128)}', space=vmem, size = 0x12000, scoped, tag = 'internal scratch']
  #allocation2 [shape = 'f32[8,32]{1,0:T(8,128)}', space=vmem, size = 0x1000, scoped, tag = 'scratch operand']
  #allocation3 [shape = 'f32[1]{0:T(128)S(6)}', space=smem, size = 0x200, scoped, tag = 'scoped memory for tpu_custom_call.1']
  %s0 = inlined_call_operand.vmem [shape: f32[2], index: 0, kind: input, shape index: {}]
  %s1 = inlined_call_operand.vmem [shape: f32[2], index: 1, kind: input, shape index: {}]
  %s2 = inlined_call_operand.<no memory space> [shape: f32[1], index: 2, kind: input, shape index: {}]
  %s3 = inlined_call_operand.vmem [shape: f32[8,1], index: 3, kind: input, shape index: {}]
  %s4 = inlined_call_operand.vmem [shape: f32[1,32], index: 4, kind: input, shape index: {}]
  %s5 = inlined_call_operand.vmem [shape: f32[1,32], index: 5, kind: input, shape index: {}]
  %s6 = inlined_call_operand.vmem [shape: f32[32,32], index: 6, kind: input, shape index: {}]
  %s7 = inlined_call_operand.vmem [shape: bf16[8,1024], index: 7, kind: input, shape index: {}]
  %s8 = inlined_call_operand.vmem [shape: bf16[8,1024], index: 8, kind: input, shape index: {}]
  %s9 = inlined_call_operand.vmem [shape: bf16[1024,32], index: 9, kind: input, shape index: {}]
  %s10 = inlined_call_operand.hbm [shape: f32[1,1], index: 10, kind: output, shape index: {}]
  %s11 = sld [smem:[#allocation0]]
  $region89: #{tpu_custom_call.1} parent=0
    _
  %s13 = ssub.s32 1, %s11
  %s14 = scalar_select 0, %s13, %s11
  %15 = sst [smem:[#allocation3]] %s2
  $region1: #{tpu_custom_call.1} parent=0
    #allocation4 [shape = 'u8[512]{0}', space=smem, size = 0x200, scoped, tag = 'input window, operand 0, single buffered']
    #allocation5 [shape = 's32[2]{0}', space=sflag, size = 0x8, scoped, tag = 'scoped memory for tpu_custom_call.1']
    #allocation6 [shape = 's32[2]{0}', space=sflag, size = 0x8, scoped, tag = 'scoped memory for tpu_custom_call.1']
    #allocation7 [shape = 'u8[512]{0}', space=smem, size = 0x200, scoped, tag = 'input window, operand 1, single buffered']
    #allocation8 [shape = 's32[1]{0}', space=sflag, size = 0x4, scoped, tag = 'scoped memory for tpu_custom_call.1']
    #allocation9 [shape = 'u8[512]{0}', space=smem, size = 0x200, scoped, tag = 'output window, operand 0, single buffered']
    %16 = vsyncpa [#allocation6], 0
    %17 = vsyncpa [#allocation8], 0
    %18 = vsyncpa [#allocation5], 0
    loop: start=0, step=1, limit=4
    $region2: #{tpu_custom_call.1} parent=1 // loop_pre_header
      _
    $region3: #{tpu_custom_call.1} parent=1 // loop_header
      %s20 = sphi 0, %s24
      %p21 = scmp.ge.s32.totalorder %s20, 4
      %s28 = sphi 0, %s28
      %s30 = sphi 0, %s28
      %s31 = sphi 0, %s30
      %s45 = sphi 0, %s31
      %s49 = sphi 0, %s49
      %s51 = sphi 0, %s49
      %s52 = sphi 0, %s51
      %s66 = sphi 0, %s52
      %s70 = sphi 0, %s70
      %s72 = sphi 0, %s70
      %s73 = sphi 0, %s72
      %s87 = sphi 0, %s73
      %s91 = sphi 0, %s91
      %s93 = sphi 0, %s91
      %s94 = sphi 0, %s93
      %s108 = sphi 0, %s94
      %s112 = sphi 0, %s112
      %s114 = sphi 0, %s112
      %s115 = sphi 0, %s114
      %s129 = sphi 0, %s115
      %s133 = sphi 0, %s133
      %s135 = sphi 0, %s133
      %s136 = sphi 0, %s135
      %s150 = sphi 0, %s136
      %s154 = sphi 0, %s154
      %s156 = sphi 0, %s154
      %s157 = sphi 0, %s156
      %s171 = sphi 0, %s157
      %s177 = sphi 0, %s179
      %s180 = sphi 0, %s177
      %s181 = sphi 0, %s180
      %s197 = sphi 0, %s181
      %s203 = sphi 0, %s205
      %s206 = sphi 0, %s203
      %s207 = sphi 0, %s206
      %s223 = sphi 0, %s207
      %s229 = sphi 0, %s231
      %s232 = sphi 0, %s229
      %s233 = sphi 0, %s232
      %s249 = sphi 0, %s233
      %s253 = sphi 0, %s253
      %s255 = sphi 0, %s253
      %s256 = sphi 0, %s255
      %s270 = sphi 0, %s256
    $region4: #{tpu_custom_call.1} parent=1 // loop_header_branch
      %23 = sbr.rel (%p21) target = $region8
    $region5: #{tpu_custom_call.1} parent=1 // loop_body
      %s25 = ssub.s32 %s20, 1
      %s26 = ssub.s32 %s20, 2
      %s27 = sadd.s32 %s20, 1
      %s29 = sadd.s32 %s28, 1
      %p32 = scmp.eq.s32.totalorder %s20, 1
      %p33 = scmp.ne.s32.totalorder %s28, %s30
      %p34 = scmp.eq.s32.totalorder %s20, 0
      %p35 = por %p33, %p34
      %p36 = scmp.ne.s32.totalorder %s28, %s30
      %p37 = scmp.eq.s32.totalorder %s25, 1
      %p38 = por %p36, %p37
      %p39 = scmp.ne.s32.totalorder %s30, %s31
      %p40 = scmp.eq.s32.totalorder %s25, 0
      %p41 = por %p39, %p40
      %p42 = scmp.ne.s32.totalorder %s30, %s31
      %p43 = scmp.eq.s32.totalorder %s26, 1
      %p44 = por %p42, %p43
      %p46 = scmp.ne.s32.totalorder %s31, %s45
      %p47 = scmp.eq.s32.totalorder %s26, 0
      %p48 = por %p46, %p47
      %s50 = sadd.s32 %s49, 1
      %p53 = scmp.eq.s32.totalorder %s20, 1
      %p54 = scmp.ne.s32.totalorder %s49, %s51
      %p55 = scmp.eq.s32.totalorder %s20, 0
      %p56 = por %p54, %p55
      %p57 = scmp.ne.s32.totalorder %s49, %s51
      %p58 = scmp.eq.s32.totalorder %s25, 1
      %p59 = por %p57, %p58
      %p60 = scmp.ne.s32.totalorder %s51, %s52
      %p61 = scmp.eq.s32.totalorder %s25, 0
      %p62 = por %p60, %p61
      %p63 = scmp.ne.s32.totalorder %s51, %s52
      %p64 = scmp.eq.s32.totalorder %s26, 1
      %p65 = por %p63, %p64
      %p67 = scmp.ne.s32.totalorder %s52, %s66
      %p68 = scmp.eq.s32.totalorder %s26, 0
      %p69 = por %p67, %p68
      %s71 = sadd.s32 %s70, 1
      %p74 = scmp.eq.s32.totalorder %s20, 1
      %p75 = scmp.ne.s32.totalorder %s70, %s72
      %p76 = scmp.eq.s32.totalorder %s20, 0
      %p77 = por %p75, %p76
      %p78 = scmp.ne.s32.totalorder %s70, %s72
      %p79 = scmp.eq.s32.totalorder %s25, 1
      %p80 = por %p78, %p79
      %p81 = scmp.ne.s32.totalorder %s72, %s73
      %p82 = scmp.eq.s32.totalorder %s25, 0
      %p83 = por %p81, %p82
      %p84 = scmp.ne.s32.totalorder %s72, %s73
      %p85 = scmp.eq.s32.totalorder %s26, 1
      %p86 = por %p84, %p85
      %p88 = scmp.ne.s32.totalorder %s73, %s87
      %p89 = scmp.eq.s32.totalorder %s26, 0
      %p90 = por %p88, %p89
      %s92 = sadd.s32 %s91, 1
      %p95 = scmp.eq.s32.totalorder %s20, 1
      %p96 = scmp.ne.s32.totalorder %s91, %s93
      %p97 = scmp.eq.s32.totalorder %s20, 0
      %p98 = por %p96, %p97
      %p99 = scmp.ne.s32.totalorder %s91, %s93
      %p100 = scmp.eq.s32.totalorder %s25, 1
      %p101 = por %p99, %p100
      %p102 = scmp.ne.s32.totalorder %s93, %s94
      %p103 = scmp.eq.s32.totalorder %s25, 0
      %p104 = por %p102, %p103
      %p105 = scmp.ne.s32.totalorder %s93, %s94
      %p106 = scmp.eq.s32.totalorder %s26, 1
      %p107 = por %p105, %p106
      %p109 = scmp.ne.s32.totalorder %s94, %s108
      %p110 = scmp.eq.s32.totalorder %s26, 0
      %p111 = por %p109, %p110
      %s113 = sadd.s32 %s112, 1
      %p116 = scmp.eq.s32.totalorder %s20, 1
      %p117 = scmp.ne.s32.totalorder %s112, %s114
      %p118 = scmp.eq.s32.totalorder %s20, 0
      %p119 = por %p117, %p118
      %p120 = scmp.ne.s32.totalorder %s112, %s114
      %p121 = scmp.eq.s32.totalorder %s25, 1
      %p122 = por %p120, %p121
      %p123 = scmp.ne.s32.totalorder %s114, %s115
      %p124 = scmp.eq.s32.totalorder %s25, 0
      %p125 = por %p123, %p124
      %p126 = scmp.ne.s32.totalorder %s114, %s115
      %p127 = scmp.eq.s32.totalorder %s26, 1
      %p128 = por %p126, %p127
      %p130 = scmp.ne.s32.totalorder %s115, %s129
      %p131 = scmp.eq.s32.totalorder %s26, 0
      %p132 = por %p130, %p131
      %s134 = sadd.s32 %s133, 1
      %p137 = scmp.eq.s32.totalorder %s20, 1
      %p138 = scmp.ne.s32.totalorder %s133, %s135
      %p139 = scmp.eq.s32.totalorder %s20, 0
      %p140 = por %p138, %p139
      %p141 = scmp.ne.s32.totalorder %s133, %s135
      %p142 = scmp.eq.s32.totalorder %s25, 1
      %p143 = por %p141, %p142
      %p144 = scmp.ne.s32.totalorder %s135, %s136
      %p145 = scmp.eq.s32.totalorder %s25, 0
      %p146 = por %p144, %p145
      %p147 = scmp.ne.s32.totalorder %s135, %s136
      %p148 = scmp.eq.s32.totalorder %s26, 1
      %p149 = por %p147, %p148
      %p151 = scmp.ne.s32.totalorder %s136, %s150
      %p152 = scmp.eq.s32.totalorder %s26, 0
      %p153 = por %p151, %p152
      %s155 = sadd.s32 %s154, 1
      %p158 = scmp.eq.s32.totalorder %s20, 1
      %p159 = scmp.ne.s32.totalorder %s154, %s156
      %p160 = scmp.eq.s32.totalorder %s20, 0
      %p161 = por %p159, %p160
      %p162 = scmp.ne.s32.totalorder %s154, %s156
      %p163 = scmp.eq.s32.totalorder %s25, 1
      %p164 = por %p162, %p163
      %p165 = scmp.ne.s32.totalorder %s156, %s157
      %p166 = scmp.eq.s32.totalorder %s25, 0
      %p167 = por %p165, %p166
      %p168 = scmp.ne.s32.totalorder %s156, %s157
      %p169 = scmp.eq.s32.totalorder %s26, 1
      %p170 = por %p168, %p169
      %p172 = scmp.ne.s32.totalorder %s157, %s171
      %p173 = scmp.eq.s32.totalorder %s26, 0
      %p174 = por %p172, %p173
      %s175 = ssub.s32 %s20, %s27
      %p176 = scmp.eq.s32.totalorder %s175, 0
      %s178 = sadd.s32 %s177, 1
      %s179 = scalar_select %p176, %s177, %s178
      %p182 = pneg %p176
      %p183 = scmp.eq.s32.totalorder %s20, 1
      %p184 = por %p182, %p183
      %p185 = scmp.ne.s32.totalorder %s177, %s180
      %p186 = scmp.eq.s32.totalorder %s20, 0
      %p187 = por %p185, %p186
      %p188 = scmp.ne.s32.totalorder %s177, %s180
      %p189 = scmp.eq.s32.totalorder %s25, 1
      %p190 = por %p188, %p189
      %p191 = scmp.ne.s32.totalorder %s180, %s181
      %p192 = scmp.eq.s32.totalorder %s25, 0
      %p193 = por %p191, %p192
      %p194 = scmp.ne.s32.totalorder %s180, %s181
      %p195 = scmp.eq.s32.totalorder %s26, 1
      %p196 = por %p194, %p195
      %p198 = scmp.ne.s32.totalorder %s181, %s197
      %p199 = scmp.eq.s32.totalorder %s26, 0
      %p200 = por %p198, %p199
      %s201 = ssub.s32 %s20, %s27
      %p202 = scmp.eq.s32.totalorder %s201, 0
      %s204 = sadd.s32 %s203, 1
      %s205 = scalar_select %p202, %s203, %s204
      %p208 = pneg %p202
      %p209 = scmp.eq.s32.totalorder %s20, 1
      %p210 = por %p208, %p209
      %p211 = scmp.ne.s32.totalorder %s203, %s206
      %p212 = scmp.eq.s32.totalorder %s20, 0
      %p213 = por %p211, %p212
      %p214 = scmp.ne.s32.totalorder %s203, %s206
      %p215 = scmp.eq.s32.totalorder %s25, 1
      %p216 = por %p214, %p215
      %p217 = scmp.ne.s32.totalorder %s206, %s207
      %p218 = scmp.eq.s32.totalorder %s25, 0
      %p219 = por %p217, %p218
      %p220 = scmp.ne.s32.totalorder %s206, %s207
      %p221 = scmp.eq.s32.totalorder %s26, 1
      %p222 = por %p220, %p221
      %p224 = scmp.ne.s32.totalorder %s207, %s223
      %p225 = scmp.eq.s32.totalorder %s26, 0
      %p226 = por %p224, %p225
      %s227 = ssub.s32 %s20, %s27
      %p228 = scmp.eq.s32.totalorder %s227, 0
      %s230 = sadd.s32 %s229, 1
      %s231 = scalar_select %p228, %s229, %s230
      %p234 = pneg %p228
      %p235 = scmp.eq.s32.totalorder %s20, 1
      %p236 = por %p234, %p235
      %p237 = scmp.ne.s32.totalorder %s229, %s232
      %p238 = scmp.eq.s32.totalorder %s20, 0
      %p239 = por %p237, %p238
      %p240 = scmp.ne.s32.totalorder %s229, %s232
      %p241 = scmp.eq.s32.totalorder %s25, 1
      %p242 = por %p240, %p241
      %p243 = scmp.ne.s32.totalorder %s232, %s233
      %p244 = scmp.eq.s32.totalorder %s25, 0
      %p245 = por %p243, %p244
      %p246 = scmp.ne.s32.totalorder %s232, %s233
      %p247 = scmp.eq.s32.totalorder %s26, 1
      %p248 = por %p246, %p247
      %p250 = scmp.ne.s32.totalorder %s233, %s249
      %p251 = scmp.eq.s32.totalorder %s26, 0
      %p252 = por %p250, %p251
      %s254 = sadd.s32 %s253, 1
      %p257 = scmp.eq.s32.totalorder %s20, 1
      %p258 = scmp.ne.s32.totalorder %s253, %s255
      %p259 = scmp.eq.s32.totalorder %s20, 0
      %p260 = por %p258, %p259
      %p261 = scmp.ne.s32.totalorder %s253, %s255
      %p262 = scmp.eq.s32.totalorder %s25, 1
      %p263 = por %p261, %p262
      %p264 = scmp.ne.s32.totalorder %s255, %s256
      %p265 = scmp.eq.s32.totalorder %s25, 0
      %p266 = por %p264, %p265
      %p267 = scmp.ne.s32.totalorder %s255, %s256
      %p268 = scmp.eq.s32.totalorder %s26, 1
      %p269 = por %p267, %p268
      %p271 = scmp.ne.s32.totalorder %s256, %s270
      %p272 = scmp.eq.s32.totalorder %s26, 0
      %p273 = por %p271, %p272
      %p274 = scmp.le.s32.totalorder 1, %s20
      %p275 = scmp.lt.s32.totalorder %s20, 3
      %p276 = pnand %p274, %p275
      %p277 = pneg %p276
      // Predicated region
      $region9: #{tpu_custom_call.1} parent=5 // pred_check
        _
      $region10: #{tpu_custom_call.1} parent=5 // pred_check_branch
        %279 = sbr.rel (%p276) target = $region12
      $region11: #{tpu_custom_call.1} parent=5 // pred_region
        %s280 = ssub.s32 %s20, 1
        // Predicated region
        $region13: #{tpu_custom_call.1} parent=11 // pred_check
          %p281 = pneg %p41
        $region14: #{tpu_custom_call.1} parent=11 // pred_check_branch
          %283 = sbr.rel (%p281) target = $region16
        $region15: #{tpu_custom_call.1} parent=11 // pred_region
          %s285 = ssub.s32 16, 16
          %286 = vsyncadd [#allocation6], %s285
          %s288 = sshll.u32 %s0, 4
          %s289 = int_to_ptr.vmem [resolvable:$true] %s288
          %291 = dma.vmem_to_smem %s289, 16, [#allocation4], [#allocation6]
        $region16: #{tpu_custom_call.1} parent=11 // pred_fallthru
          _
        // Predicated region
        $region17: #{tpu_custom_call.1} parent=11 // pred_check
          %p292 = pneg %p62
        $region18: #{tpu_custom_call.1} parent=11 // pred_check_branch
          %294 = sbr.rel (%p292) target = $region20
        $region19: #{tpu_custom_call.1} parent=11 // pred_region
          %s296 = ssub.s32 16, 16
          %297 = vsyncadd [#allocation8], %s296
          %s299 = sshll.u32 %s1, 4
          %s300 = int_to_ptr.vmem [resolvable:$true] %s299
          %302 = dma.vmem_to_smem %s300, 16, [#allocation7], [#allocation8]
        $region20: #{tpu_custom_call.1} parent=11 // pred_fallthru
          _
        // Predicated region
        $region21: #{tpu_custom_call.1} parent=11 // pred_check
          %p303 = pneg %p83
        $region22: #{tpu_custom_call.1} parent=11 // pred_check_branch
          %305 = sbr.rel (%p303) target = $region24
        $region23: #{tpu_custom_call.1} parent=11 // pred_region
          _
        $region24: #{tpu_custom_call.1} parent=11 // pred_fallthru
          _
        // Predicated region
        $region25: #{tpu_custom_call.1} parent=11 // pred_check
          %p306 = pneg %p104
        $region26: #{tpu_custom_call.1} parent=11 // pred_check_branch
          %308 = sbr.rel (%p306) target = $region28
        $region27: #{tpu_custom_call.1} parent=11 // pred_region
          _
        $region28: #{tpu_custom_call.1} parent=11 // pred_fallthru
          _
        // Predicated region
        $region29: #{tpu_custom_call.1} parent=11 // pred_check
          %p309 = pneg %p125
        $region30: #{tpu_custom_call.1} parent=11 // pred_check_branch
          %311 = sbr.rel (%p309) target = $region32
        $region31: #{tpu_custom_call.1} parent=11 // pred_region
          _
        $region32: #{tpu_custom_call.1} parent=11 // pred_fallthru
          _
        // Predicated region
        $region33: #{tpu_custom_call.1} parent=11 // pred_check
          %p312 = pneg %p146
        $region34: #{tpu_custom_call.1} parent=11 // pred_check_branch
          %314 = sbr.rel (%p312) target = $region36
        $region35: #{tpu_custom_call.1} parent=11 // pred_region
          _
        $region36: #{tpu_custom_call.1} parent=11 // pred_fallthru
          _
        // Predicated region
        $region37: #{tpu_custom_call.1} parent=11 // pred_check
          %p315 = pneg %p167
        $region38: #{tpu_custom_call.1} parent=11 // pred_check_branch
          %317 = sbr.rel (%p315) target = $region40
        $region39: #{tpu_custom_call.1} parent=11 // pred_region
          _
        $region40: #{tpu_custom_call.1} parent=11 // pred_fallthru
          _
      $region12: #{tpu_custom_call.1} parent=5 // pred_fallthru
        _
      %p318 = scmp.lt.s32.totalorder %s20, 2
      // Predicated region
      $region41: #{tpu_custom_call.1} parent=5 // pred_check
        %p319 = pneg %p318
      $region42: #{tpu_custom_call.1} parent=5 // pred_check_branch
        %321 = sbr.rel (%p319) target = $region44
      $region43: #{tpu_custom_call.1} parent=5 // pred_region
        // Predicated region
        $region45: #{tpu_custom_call.1} parent=43 // pred_check
          %p322 = pneg %p187
        $region46: #{tpu_custom_call.1} parent=43 // pred_check_branch
          %324 = sbr.rel (%p322) target = $region48
        $region47: #{tpu_custom_call.1} parent=43 // pred_region
          %s325 = smul.u32 4, %s20
          %p326 = scmp.lt.s32.totalorder %s325, 7
          %s327 = scalar_select %p326, %s325, 7
          %s328 = smul.addr %s327, 4
          %s329 = scalar_lea.vmem %s7, %s328
          %s330 = smul.u32 4, %s20
        $region48: #{tpu_custom_call.1} parent=43 // pred_fallthru
          _
        // Predicated region
        $region49: #{tpu_custom_call.1} parent=43 // pred_check
          %p331 = pneg %p213
        $region50: #{tpu_custom_call.1} parent=43 // pred_check_branch
          %333 = sbr.rel (%p331) target = $region52
        $region51: #{tpu_custom_call.1} parent=43 // pred_region
          %s334 = smul.u32 4, %s20
          %p335 = scmp.lt.s32.totalorder %s334, 7
          %s336 = scalar_select %p335, %s334, 7
          %s337 = smul.addr %s336, 4
          %s338 = scalar_lea.vmem %s8, %s337
          %s339 = smul.u32 4, %s20
        $region52: #{tpu_custom_call.1} parent=43 // pred_fallthru
          _
        // Predicated region
        $region53: #{tpu_custom_call.1} parent=43 // pred_check
          %p340 = pneg %p239
        $region54: #{tpu_custom_call.1} parent=43 // pred_check_branch
          %342 = sbr.rel (%p340) target = $region56
        $region55: #{tpu_custom_call.1} parent=43 // pred_region
          %s343 = smul.u32 64, %s20
          %p344 = scmp.lt.s32.totalorder %s343, 127
          %s345 = scalar_select %p344, %s343, 127
          %s346 = smul.addr %s345, 4
          %s347 = scalar_lea.vmem %s9, %s346
          %s348 = smul.u32 64, %s20
        $region56: #{tpu_custom_call.1} parent=43 // pred_fallthru
          _
      $region44: #{tpu_custom_call.1} parent=5 // pred_fallthru
        _
      %p349 = scmp.le.s32.totalorder 1, %s20
      %p350 = scmp.lt.s32.totalorder %s20, 3
      %p351 = pnand %p349, %p350
      %p352 = pneg %p351
      // Predicated region
      $region57: #{tpu_custom_call.1} parent=5 // pred_check
        _
      $region58: #{tpu_custom_call.1} parent=5 // pred_check_branch
        %354 = sbr.rel (%p351) target = $region60
      $region59: #{tpu_custom_call.1} parent=5 // pred_region
        %s355 = ssub.s32 %s20, 1
        // Predicated region
        $region61: #{tpu_custom_call.1} parent=59 // pred_check
          %p356 = pneg %p41
        $region62: #{tpu_custom_call.1} parent=59 // pred_check_branch
          %358 = sbr.rel (%p356) target = $region64
        $region63: #{tpu_custom_call.1} parent=59 // pred_region
          %359 = dma.done [#allocation6], 16
        $region64: #{tpu_custom_call.1} parent=59 // pred_fallthru
          _
        // Predicated region
        $region65: #{tpu_custom_call.1} parent=59 // pred_check
          %p360 = pneg %p62
        $region66: #{tpu_custom_call.1} parent=59 // pred_check_branch
          %362 = sbr.rel (%p360) target = $region68
        $region67: #{tpu_custom_call.1} parent=59 // pred_region
          %363 = dma.done [#allocation8], 16
        $region68: #{tpu_custom_call.1} parent=59 // pred_fallthru
          _
        %364 = sfence
        %p365 = pneg %p41
        %p366 = pneg %p38
        %p367 = pneg %p62
        %p368 = pneg %p59
        %p369 = pneg %p83
        %p370 = pneg %p80
        %p371 = pneg %p104
        %p372 = pneg %p101
        %p373 = pneg %p125
        %p374 = pneg %p122
        %p375 = pneg %p146
        %p376 = pneg %p143
        %p377 = pneg %p167
        %p378 = pneg %p164
        %s379 = smul.u32 4, %s25
        %p380 = scmp.lt.s32.totalorder %s379, 7
        %s381 = scalar_select %p380, %s379, 7
        %s382 = smul.addr %s381, 4
        %s383 = scalar_lea.vmem %s7, %s382
        %p384 = pneg %p193
        %p385 = pneg %p190
        %s386 = smul.u32 4, %s25
        %p387 = scmp.lt.s32.totalorder %s386, 7
        %s388 = scalar_select %p387, %s386, 7
        %s389 = smul.addr %s388, 4
        %s390 = scalar_lea.vmem %s8, %s389
        %p391 = pneg %p219
        %p392 = pneg %p216
        %s393 = smul.u32 64, %s25
        %p394 = scmp.lt.s32.totalorder %s393, 127
        %s395 = scalar_select %p394, %s393, 127
        %s396 = smul.addr %s395, 4
        %s397 = scalar_lea.vmem %s9, %s396
        %p398 = pneg %p245
        %p399 = pneg %p242
        %p400 = pneg %p266
        %p401 = pneg %p263
        %s402 = smul.u32 4, %s25
        %p403 = scmp.lt.s32.totalorder %s402, 7
        %s404 = scalar_select %p403, %s402, 7
        %s405 = smul.addr %s404, 4
        %s406 = scalar_lea.vmem %s7, %s405
        %s407 = smul.u32 4, %s25
        %s408 = smul.u32 4, %s25
        %p409 = scmp.lt.s32.totalorder %s408, 7
        %s410 = scalar_select %p409, %s408, 7
        %s411 = smul.addr %s410, 4
        %s412 = scalar_lea.vmem %s8, %s411
        %s413 = smul.u32 4, %s25
        %s414 = smul.u32 64, %s25
        %p415 = scmp.lt.s32.totalorder %s414, 127
        %s416 = scalar_select %p415, %s414, 127
        %s417 = smul.addr %s416, 4
        %s418 = scalar_lea.vmem %s9, %s417
        %s419 = smul.u32 64, %s25
        %p421 = scmp.eq.s32.totalorder %s25, 0
        // Predicated region
        $region69: #{tpu_custom_call.1} parent=59 // pred_check
          %p422 = pneg %p421
        $region70: #{tpu_custom_call.1} parent=59 // pred_check_branch
          %424 = sbr.rel (%p422) target = $region72
        $region71: #{tpu_custom_call.1} parent=59 // pred_region
          %vm425 = vcmask 261120
          %426 = vst.msk [vmem:[#allocation2] sm:$0xff] %vm425, 0.0
        $region72: #{tpu_custom_call.1} parent=59 // pred_fallthru
          _
        %v427 = vld [vmem:[%s3] sm:$0xff]
        %v428 = vld [vmem:[%s406] sm:$0xff]
        %v429 = vld [vmem:[%s406 + $0x8] sm:$0xff]
        %v430 = vunpack.c.l.bf16 %v428
        %v431 = vunpack.c.h.bf16 %v428
        %v432 = vunpack.c.l.bf16 %v429
        %v433 = vunpack.c.h.bf16 %v429
        %435 = vset.pattern.permute.xlu0 0
        %436 = vperm.xlu0 %435, %v427
        %v437 = vpop.permute.xlu0 %436
        %v439 = vmul.f32 %v430, %v437
        %v440 = vmul.f32 %v431, %v437
        %v441 = vmul.f32 %v432, %v437
        %v442 = vmul.f32 %v433, %v437
        %v443 = vld [vmem:[%s412] sm:$0xff]
        %v444 = vld [vmem:[%s412 + $0x8] sm:$0xff]
        %v445 = vunpack.c.l.bf16 %v443
        %v446 = vunpack.c.h.bf16 %v443
        %v447 = vunpack.c.l.bf16 %v444
        %v448 = vunpack.c.h.bf16 %v444
        %v449 = vsub.f32 1.0, %v427
        %451 = vset.pattern.permute.xlu0 0
        %452 = vperm.xlu0 %451, %v449
        %v453 = vpop.permute.xlu0 %452
        %v455 = vmul.f32 %v445, %v453
        %v456 = vmul.f32 %v446, %v453
        %v457 = vmul.f32 %v447, %v453
        %v458 = vmul.f32 %v448, %v453
        %v459 = vadd.f32 %v439, %v455
        %v460 = vadd.f32 %v440, %v456
        %v461 = vadd.f32 %v441, %v457
        %v462 = vadd.f32 %v442, %v458
        %v463 = vld [vmem:[#allocation2] sm:$0xff]
        %v464 = vpack.c.bf16 %v459, %v459
        %v465 = vpack.c.bf16 %v460, %v460
        %v466 = vpack.c.bf16 %v461, %v461
        %v467 = vpack.c.bf16 %v462, %v462
        %v468 = vld [vmem:[%s418] sm:$0xf]
        %v469 = vld [vmem:[%s418 + $0x4] sm:$0xf]
        %v470 = vld [vmem:[%s418 + $0x8] sm:$0xf]
        %v471 = vld [vmem:[%s418 + $0xc] sm:$0xf]
        %v472 = vld [vmem:[%s418 + $0x10] sm:$0xf]
        %v473 = vld [vmem:[%s418 + $0x14] sm:$0xf]
        %v474 = vld [vmem:[%s418 + $0x18] sm:$0xf]
        %v475 = vld [vmem:[%s418 + $0x1c] sm:$0xf]
        %v476 = vld [vmem:[%s418 + $0x20] sm:$0xf]
        %v477 = vld [vmem:[%s418 + $0x24] sm:$0xf]
        %v478 = vld [vmem:[%s418 + $0x28] sm:$0xf]
        %v479 = vld [vmem:[%s418 + $0x2c] sm:$0xf]
        %v480 = vld [vmem:[%s418 + $0x30] sm:$0xf]
        %v481 = vld [vmem:[%s418 + $0x34] sm:$0xf]
        %v482 = vld [vmem:[%s418 + $0x38] sm:$0xf]
        %v483 = vld [vmem:[%s418 + $0x3c] sm:$0xf]
        %v484 = vld [vmem:[%s418 + $0x40] sm:$0xf]
        %v485 = vld [vmem:[%s418 + $0x44] sm:$0xf]
        %v486 = vld [vmem:[%s418 + $0x48] sm:$0xf]
        %v487 = vld [vmem:[%s418 + $0x4c] sm:$0xf]
        %v488 = vld [vmem:[%s418 + $0x50] sm:$0xf]
        %v489 = vld [vmem:[%s418 + $0x54] sm:$0xf]
        %v490 = vld [vmem:[%s418 + $0x58] sm:$0xf]
        %v491 = vld [vmem:[%s418 + $0x5c] sm:$0xf]
        %v492 = vld [vmem:[%s418 + $0x60] sm:$0xf]
        %v493 = vld [vmem:[%s418 + $0x64] sm:$0xf]
        %v494 = vld [vmem:[%s418 + $0x68] sm:$0xf]
        %v495 = vld [vmem:[%s418 + $0x6c] sm:$0xf]
        %v496 = vld [vmem:[%s418 + $0x70] sm:$0xf]
        %v497 = vld [vmem:[%s418 + $0x74] sm:$0xf]
        %v498 = vld [vmem:[%s418 + $0x78] sm:$0xf]
        %v499 = vld [vmem:[%s418 + $0x7c] sm:$0xf]
        %v500 = vld [vmem:[%s418 + $0x80] sm:$0xf]
        %v501 = vld [vmem:[%s418 + $0x84] sm:$0xf]
        %v502 = vld [vmem:[%s418 + $0x88] sm:$0xf]
        %v503 = vld [vmem:[%s418 + $0x8c] sm:$0xf]
        %v504 = vld [vmem:[%s418 + $0x90] sm:$0xf]
        %v505 = vld [vmem:[%s418 + $0x94] sm:$0xf]
        %v506 = vld [vmem:[%s418 + $0x98] sm:$0xf]
        %v507 = vld [vmem:[%s418 + $0x9c] sm:$0xf]
        %v508 = vld [vmem:[%s418 + $0xa0] sm:$0xf]
        %v509 = vld [vmem:[%s418 + $0xa4] sm:$0xf]
        %v510 = vld [vmem:[%s418 + $0xa8] sm:$0xf]
        %v511 = vld [vmem:[%s418 + $0xac] sm:$0xf]
        %v512 = vld [vmem:[%s418 + $0xb0] sm:$0xf]
        %v513 = vld [vmem:[%s418 + $0xb4] sm:$0xf]
        %v514 = vld [vmem:[%s418 + $0xb8] sm:$0xf]
        %v515 = vld [vmem:[%s418 + $0xbc] sm:$0xf]
        %v516 = vld [vmem:[%s418 + $0xc0] sm:$0xf]
        %v517 = vld [vmem:[%s418 + $0xc4] sm:$0xf]
        %v518 = vld [vmem:[%s418 + $0xc8] sm:$0xf]
        %v519 = vld [vmem:[%s418 + $0xcc] sm:$0xf]
        %v520 = vld [vmem:[%s418 + $0xd0] sm:$0xf]
        %v521 = vld [vmem:[%s418 + $0xd4] sm:$0xf]
        %v522 = vld [vmem:[%s418 + $0xd8] sm:$0xf]
        %v523 = vld [vmem:[%s418 + $0xdc] sm:$0xf]
        %v524 = vld [vmem:[%s418 + $0xe0] sm:$0xf]
        %v525 = vld [vmem:[%s418 + $0xe4] sm:$0xf]
        %v526 = vld [vmem:[%s418 + $0xe8] sm:$0xf]
        %v527 = vld [vmem:[%s418 + $0xec] sm:$0xf]
        %v528 = vld [vmem:[%s418 + $0xf0] sm:$0xf]
        %v529 = vld [vmem:[%s418 + $0xf4] sm:$0xf]
        %v530 = vld [vmem:[%s418 + $0xf8] sm:$0xf]
        %v531 = vld [vmem:[%s418 + $0xfc] sm:$0xf]
        %v596 = vunpack.c.l.b16 %v468
        %v597 = vunpack.c.l.b16 %v469
        %v598 = vunpack.c.l.b16 %v470
        %v599 = vunpack.c.l.b16 %v471
        %v600 = vunpack.c.l.b16 %v472
        %v601 = vunpack.c.l.b16 %v473
        %v602 = vunpack.c.l.b16 %v474
        %v603 = vunpack.c.l.b16 %v475
        %v604 = vunpack.c.l.b16 %v476
        %v605 = vunpack.c.l.b16 %v477
        %v606 = vunpack.c.l.b16 %v478
        %v607 = vunpack.c.l.b16 %v479
        %v608 = vunpack.c.l.b16 %v480
        %v609 = vunpack.c.l.b16 %v481
        %v610 = vunpack.c.l.b16 %v482
        %v611 = vunpack.c.l.b16 %v483
        %v612 = vunpack.c.l.b16 %v484
        %v613 = vunpack.c.l.b16 %v485
        %v614 = vunpack.c.l.b16 %v486
        %v615 = vunpack.c.l.b16 %v487
        %v616 = vunpack.c.l.b16 %v488
        %v617 = vunpack.c.l.b16 %v489
        %v618 = vunpack.c.l.b16 %v490
        %v619 = vunpack.c.l.b16 %v491
        %v620 = vunpack.c.l.b16 %v492
        %v621 = vunpack.c.l.b16 %v493
        %v622 = vunpack.c.l.b16 %v494
        %v623 = vunpack.c.l.b16 %v495
        %v624 = vunpack.c.l.b16 %v496
        %v625 = vunpack.c.l.b16 %v497
        %v626 = vunpack.c.l.b16 %v498
        %v627 = vunpack.c.l.b16 %v499
        %v628 = vunpack.c.l.b16 %v500
        %v629 = vunpack.c.l.b16 %v501
        %v630 = vunpack.c.l.b16 %v502
        %v631 = vunpack.c.l.b16 %v503
        %v632 = vunpack.c.l.b16 %v504
        %v633 = vunpack.c.l.b16 %v505
        %v634 = vunpack.c.l.b16 %v506
        %v635 = vunpack.c.l.b16 %v507
        %v636 = vunpack.c.l.b16 %v508
        %v637 = vunpack.c.l.b16 %v509
        %v638 = vunpack.c.l.b16 %v510
        %v639 = vunpack.c.l.b16 %v511
        %v640 = vunpack.c.l.b16 %v512
        %v641 = vunpack.c.l.b16 %v513
        %v642 = vunpack.c.l.b16 %v514
        %v643 = vunpack.c.l.b16 %v515
        %v644 = vunpack.c.l.b16 %v516
        %v645 = vunpack.c.l.b16 %v517
        %v646 = vunpack.c.l.b16 %v518
        %v647 = vunpack.c.l.b16 %v519
        %v648 = vunpack.c.l.b16 %v520
        %v649 = vunpack.c.l.b16 %v521
        %v650 = vunpack.c.l.b16 %v522
        %v651 = vunpack.c.l.b16 %v523
        %v652 = vunpack.c.l.b16 %v524
        %v653 = vunpack.c.l.b16 %v525
        %v654 = vunpack.c.l.b16 %v526
        %v655 = vunpack.c.l.b16 %v527
        %v656 = vunpack.c.l.b16 %v528
        %v657 = vunpack.c.l.b16 %v529
        %v658 = vunpack.c.l.b16 %v530
        %v659 = vunpack.c.l.b16 %v531
        %v660 = vpack.c.b16 %v597, %v596
        %v661 = vpack.c.b16 %v599, %v598
        %v662 = vpack.c.b16 %v601, %v600
        %v663 = vpack.c.b16 %v603, %v602
        %v664 = vpack.c.b16 %v605, %v604
        %v665 = vpack.c.b16 %v607, %v606
        %v666 = vpack.c.b16 %v609, %v608
        %v667 = vpack.c.b16 %v611, %v610
        %v668 = vpack.c.b16 %v613, %v612
        %v669 = vpack.c.b16 %v615, %v614
        %v670 = vpack.c.b16 %v617, %v616
        %v671 = vpack.c.b16 %v619, %v618
        %v672 = vpack.c.b16 %v621, %v620
        %v673 = vpack.c.b16 %v623, %v622
        %v674 = vpack.c.b16 %v625, %v624
        %v675 = vpack.c.b16 %v627, %v626
        %v676 = vpack.c.b16 %v629, %v628
        %v677 = vpack.c.b16 %v631, %v630
        %v678 = vpack.c.b16 %v633, %v632
        %v679 = vpack.c.b16 %v635, %v634
        %v680 = vpack.c.b16 %v637, %v636
        %v681 = vpack.c.b16 %v639, %v638
        %v682 = vpack.c.b16 %v641, %v640
        %v683 = vpack.c.b16 %v643, %v642
        %v684 = vpack.c.b16 %v645, %v644
        %v685 = vpack.c.b16 %v647, %v646
        %v686 = vpack.c.b16 %v649, %v648
        %v687 = vpack.c.b16 %v651, %v650
        %v688 = vpack.c.b16 %v653, %v652
        %v689 = vpack.c.b16 %v655, %v654
        %v690 = vpack.c.b16 %v657, %v656
        %v691 = vpack.c.b16 %v659, %v658
        %724 = vmatprep.subr.bf16.mxu0 0
        %725 = vmatpush1.bf16.msra.mxu0 %v667
        %726 = vmatprep.subr.bf16.mxu0 0
        %727 = vmatpush1.bf16.msra.mxu0 %v666
        %728 = vmatprep.subr.bf16.mxu0 0
        %729 = vmatpush1.bf16.msra.mxu0 %v665
        %730 = vmatprep.subr.bf16.mxu0 0
        %731 = vmatpush1.bf16.msra.mxu0 %v664
        %732 = vmatprep.subr.bf16.mxu0 0
        %733 = vmatpush1.bf16.msra.mxu0 %v663
        %734 = vmatprep.subr.bf16.mxu0 0
        %735 = vmatpush1.bf16.msra.mxu0 %v662
        %736 = vmatprep.subr.bf16.mxu0 0
        %737 = vmatpush1.bf16.msra.mxu0 %v661
        %738 = vmatprep.subr.bf16.mxu0 0
        %739 = vmatpush1.bf16.msra.mxu0 %v660
        %740 = vmatprep.subr.bf16.mxu0 0
        %741 = vmatpush2.bf16.msra.mxu0 %v675
        %742 = vmatprep.subr.bf16.mxu0 0
        %743 = vmatpush2.bf16.msra.mxu0 %v674
        %744 = vmatprep.subr.bf16.mxu0 0
        %745 = vmatpush2.bf16.msra.mxu0 %v673
        %746 = vmatprep.subr.bf16.mxu0 0
        %747 = vmatpush2.bf16.msra.mxu0 %v672
        %748 = vmatprep.subr.bf16.mxu0 0
        %749 = vmatpush2.bf16.msra.mxu0 %v671
        %750 = vmatprep.subr.bf16.mxu0 0
        %751 = vmatpush2.bf16.msra.mxu0 %v670
        %752 = vmatprep.subr.bf16.mxu0 0
        %753 = vmatpush2.bf16.msra.mxu0 %v669
        %754 = vmatprep.subr.bf16.mxu0 0
        %755 = vmatpush2.bf16.msra.mxu0 %v668
        %756 = vmatprep.mubr.bf16.mxu0 %v465
        %757 = vmatmul.mubr.bf16.gmra.mxu0 %v464
        %v758 = vpop.f32.mrf.mxu0
        %v759 = vadd.f32 0.0, %v758
        %v760 = vpop.f32.mrf.mxu0
        %v761 = vpop.f32.mrf.mxu0
        %v762 = vpop.f32.mrf.mxu0
        %763 = vdwg.mxu0
        %764 = vmatprep.subr.bf16.mxu0 0
        %765 = vmatpush1.bf16.msra.mxu0 %v683
        %766 = vmatprep.subr.bf16.mxu0 0
        %767 = vmatpush1.bf16.msra.mxu0 %v682
        %768 = vmatprep.subr.bf16.mxu0 0
        %769 = vmatpush1.bf16.msra.mxu0 %v681
        %770 = vmatprep.subr.bf16.mxu0 0
        %771 = vmatpush1.bf16.msra.mxu0 %v680
        %772 = vmatprep.subr.bf16.mxu0 0
        %773 = vmatpush1.bf16.msra.mxu0 %v679
        %774 = vmatprep.subr.bf16.mxu0 0
        %775 = vmatpush1.bf16.msra.mxu0 %v678
        %776 = vmatprep.subr.bf16.mxu0 0
        %777 = vmatpush1.bf16.msra.mxu0 %v677
        %778 = vmatprep.subr.bf16.mxu0 0
        %779 = vmatpush1.bf16.msra.mxu0 %v676
        %780 = vmatprep.subr.bf16.mxu0 0
        %781 = vmatpush2.bf16.msra.mxu0 %v691
        %782 = vmatprep.subr.bf16.mxu0 0
        %783 = vmatpush2.bf16.msra.mxu0 %v690
        %784 = vmatprep.subr.bf16.mxu0 0
        %785 = vmatpush2.bf16.msra.mxu0 %v689
        %786 = vmatprep.subr.bf16.mxu0 0
        %787 = vmatpush2.bf16.msra.mxu0 %v688
        %788 = vmatprep.subr.bf16.mxu0 0
        %789 = vmatpush2.bf16.msra.mxu0 %v687
        %790 = vmatprep.subr.bf16.mxu0 0
        %791 = vmatpush2.bf16.msra.mxu0 %v686
        %792 = vmatprep.subr.bf16.mxu0 0
        %793 = vmatpush2.bf16.msra.mxu0 %v685
        %794 = vmatprep.subr.bf16.mxu0 0
        %795 = vmatpush2.bf16.msra.mxu0 %v684
        %796 = vmatprep.mubr.bf16.mxu0 %v467
        %797 = vmatmul.mubr.bf16.gmra.mxu0 %v466
        %v798 = vpop.f32.mrf.mxu0
        %v799 = vadd.f32 %v759, %v798
        %v800 = vpop.f32.mrf.mxu0
        %v801 = vpop.f32.mrf.mxu0
        %v802 = vpop.f32.mrf.mxu0
        %803 = vdwg.mxu0
        %v804 = vadd.f32 %v463, %v799
        %vm805 = vcmask 261120
        %806 = vst.msk [vmem:[#allocation2] sm:$0xff] %vm805, %v804
        %p807 = scmp.eq.s32.totalorder %s25, 1
        // Predicated region
        $region73: #{tpu_custom_call.1} parent=59 // pred_check
          %p808 = pneg %p807
        $region74: #{tpu_custom_call.1} parent=59 // pred_check_branch
          %810 = sbr.rel (%p808) target = $region76
        $region75: #{tpu_custom_call.1} parent=59 // pred_region
          %s811 = sld [smem:[#allocation3]]
          %v812 = vld [vmem:[#allocation2] sm:$0xff]
          %v813 = vstv %s811
          %v814 = vmul.f32 %v813, %v812
          %v815 = vld [vmem:[%s4] sm:$0x1]
          %v817 = vlaneseq
          %v818 = vshrl.u32 %v817, 7
          %v819 = vsub.s32 0, %v818
          %v820 = vrot.slane %v815, %v819
          %v822 = vadd.f32 %v814, %v820
          %vm823 = vcmp.gt.f32.partialorder %v822, 0.0
          %v824 = vsel %vm823, 1.0, 0.2
          %v825 = vld [vmem:[%s5] sm:$0x1]
          %v827 = vlaneseq
          %v828 = vshrl.u32 %v827, 7
          %v829 = vsub.s32 0, %v828
          %v830 = vrot.slane %v825, %v829
          %v832 = vmul.f32 %v824, %v830
          %v833 = vld [vmem:[%s6] sm:$0xff]
          %v834 = vld [vmem:[%s6 + $0x8] sm:$0xff]
          %v835 = vld [vmem:[%s6 + $0x10] sm:$0xff]
          %v836 = vld [vmem:[%s6 + $0x18] sm:$0xff]
          %v838 = vsel %vm805, %v832, 0
          %840 = vmatprep.subr.mxu0 0.0
          %841 = vmatpush1.msra.mxu0 0.0
          %842 = vmatprep.subr.mxu0 0.0
          %843 = vmatpush1.msra.mxu0 0.0
          %844 = vmatprep.subr.mxu0 0.0
          %845 = vmatpush1.msra.mxu0 0.0
          %846 = vmatprep.subr.mxu0 0.0
          %847 = vmatpush1.msra.mxu0 0.0
          %848 = vmatprep.subr.mxu0 0.0
          %849 = vmatpush1.msra.mxu0 0.0
          %850 = vmatprep.subr.mxu0 0.0
          %851 = vmatpush1.msra.mxu0 0.0
          %852 = vmatprep.subr.mxu0 0.0
          %853 = vmatpush1.msra.mxu0 0.0
          %854 = vmatprep.subr.mxu0 0.0
          %855 = vmatpush1.msra.mxu0 0.0
          %856 = vmatprep.subr.mxu0 0.0
          %857 = vmatpush1.msra.mxu0 0.0
          %858 = vmatprep.subr.mxu0 0.0
          %859 = vmatpush1.msra.mxu0 0.0
          %860 = vmatprep.subr.mxu0 0.0
          %861 = vmatpush1.msra.mxu0 0.0
          %862 = vmatprep.subr.mxu0 0.0
          %863 = vmatpush1.msra.mxu0 0.0
          %864 = vmatprep.subr.mxu0 0.0
          %865 = vmatpush1.msra.mxu0 %v836
          %866 = vmatprep.subr.mxu0 0.0
          %867 = vmatpush1.msra.mxu0 %v835
          %868 = vmatprep.subr.mxu0 0.0
          %869 = vmatpush1.msra.mxu0 %v834
          %870 = vmatprep.subr.mxu0 0.0
          %871 = vmatpush1.msra.mxu0 %v833
          %872 = vmatprep.subr.mxu0 0.0
          %873 = vmatpush2.msra.mxu0 0.0
          %874 = vmatprep.subr.mxu0 0.0
          %875 = vmatpush2.msra.mxu0 0.0
          %876 = vmatprep.subr.mxu0 0.0
          %877 = vmatpush2.msra.mxu0 0.0
          %878 = vmatprep.subr.mxu0 0.0
          %879 = vmatpush2.msra.mxu0 0.0
          %880 = vmatprep.subr.mxu0 0.0
          %881 = vmatpush2.msra.mxu0 0.0
          %882 = vmatprep.subr.mxu0 0.0
          %883 = vmatpush2.msra.mxu0 0.0
          %884 = vmatprep.subr.mxu0 0.0
          %885 = vmatpush2.msra.mxu0 0.0
          %886 = vmatprep.subr.mxu0 0.0
          %887 = vmatpush2.msra.mxu0 0.0
          %888 = vmatprep.subr.mxu0 0.0
          %889 = vmatpush2.msra.mxu0 0.0
          %890 = vmatprep.subr.mxu0 0.0
          %891 = vmatpush2.msra.mxu0 0.0
          %892 = vmatprep.subr.mxu0 0.0
          %893 = vmatpush2.msra.mxu0 0.0
          %894 = vmatprep.subr.mxu0 0.0
          %895 = vmatpush2.msra.mxu0 0.0
          %896 = vmatprep.subr.mxu0 0.0
          %897 = vmatpush2.msra.mxu0 0.0
          %898 = vmatprep.subr.mxu0 0.0
          %899 = vmatpush2.msra.mxu0 0.0
          %900 = vmatprep.subr.mxu0 0.0
          %901 = vmatpush2.msra.mxu0 0.0
          %902 = vmatprep.subr.mxu0 0.0
          %903 = vmatpush2.msra.mxu0 0.0
          %904 = vmatprep.mubr.f32.mxu0 0.0
          %905 = vmatmul.mubr.f32.gmra.mxu0 %v838
          %v906 = vpop.f32.mrf.mxu0
          %v907 = vadd.f32 0.0, %v906
          %v908 = vpop.f32.mrf.mxu0
          %909 = vdwg.mxu0
          %s910 = smul.f32 %s811, %s811
          %v911 = vmul.f32 %v907, %v832
          %v912 = vsel %vm805, %v911, 0.0
          %913 = vadd.xlane.f32.xlu0 %v912
          %v914 = vpop.xlane.xlu0 %913
          %v915 = vstv %s910
          %v916 = vmul.f32 %v915, %v914
          %v917 = vrsqrt.pop %v916
          %v918 = vmul.f32 %v916, %v917
          %vm919 = vcmp.eq.f32.partialorder %v916, inf
          %v920 = vsel %vm919, %v916, %v918
          %vm921 = vcmp.eq.f32.partialorder %v916, 0.0
          %v922 = vand.u32 %v916, 2147483648
          %v923 = vsel %vm921, %v922, %v920
          %v924 = vlaneseq
          %v925 = vshrl.u32 %v924, 7
          %vm926 = vcmp.lt.s32.totalorder %v925, 2
          %v927 = vsub.f32 %v923, 1.0
          %v928 = vmul.f32 %v927, %v927
          %v929 = vsel %vm926, %v928, 0.0
          %vm930 = vcmask 7168
          %v931 = vsel %vm930, %v929, 0.0
          %932 = vadd.xlane.f32.xlu0 %v931
          %v933 = vpop.xlane.xlu0 %932
          %v934 = vrot.slane %v933, 4
          %v935 = vadd.f32 %v933, %v934
          %v936 = vrot.slane %v935, 2
          %v937 = vadd.f32 %v935, %v936
          %v938 = vrot.slane %v937, 1
          %v939 = vadd.f32 %v937, %v938
          %s940 = vtos %v939
          %s941 = smul.f32 %s940, 0.5
          %s942 = sld [smem:[#allocation4]]
          %s943 = sld [smem:[#allocation7]]
          %s944 = sadd.f32 %s942, 0.0
          %s945 = sadd.f32 %s943, 0.0
          %s946 = smul.f32 %s942, %s942
          %s947 = sadd.f32 %s946, 0.0
          %s948 = sld [smem:[#allocation4 + $0x1]]
          %s949 = sld [smem:[#allocation7 + $0x1]]
          %s950 = sadd.f32 %s944, %s948
          %s951 = sadd.f32 %s945, %s949
          %s952 = smul.f32 %s948, %s948
          %s953 = sadd.f32 %s947, %s952
          %s954 = ssub.f32 %s951, %s950
          %s955 = smul.f32 %s954, 0.5
          %s956 = smul.f32 %s953, 0.5
          %s957 = smul.f32 %s941, 10.0
          %s958 = sadd.f32 %s955, %s957
          %s959 = smul.f32 %s956, 0.001
          %s960 = sadd.f32 %s958, %s959
          %s961 = scalar_lea.smem [#allocation9], 0
          %962 = sst [smem:[%s961]] %s960
        $region76: #{tpu_custom_call.1} parent=59 // pred_fallthru
          _
        // Predicated region
        $region77: #{tpu_custom_call.1} parent=59 // pred_check
          %p963 = pneg %p263
        $region78: #{tpu_custom_call.1} parent=59 // pred_check_branch
          %965 = sbr.rel (%p963) target = $region80
        $region79: #{tpu_custom_call.1} parent=59 // pred_region
          %s967 = ssub.s32 16, 16
          %968 = vsyncadd [#allocation5], %s967
          %971 = dma.smem_to_hbm [#allocation9], 16, %s10, [#allocation5]
        $region80: #{tpu_custom_call.1} parent=59 // pred_fallthru
          _
        // Predicated region
        $region81: #{tpu_custom_call.1} parent=59 // pred_check
          %p972 = pneg %p263
        $region82: #{tpu_custom_call.1} parent=59 // pred_check_branch
          %974 = sbr.rel (%p972) target = $region84
        $region83: #{tpu_custom_call.1} parent=59 // pred_region
          %975 = dma.done [#allocation5], 16
        $region84: #{tpu_custom_call.1} parent=59 // pred_fallthru
          _
        %976 = sfence
      $region60: #{tpu_custom_call.1} parent=5 // pred_fallthru
        _
      %p977 = scmp.le.s32.totalorder 2, %s20
      // Predicated region
      $region85: #{tpu_custom_call.1} parent=5 // pred_check
        %p978 = pneg %p977
      $region86: #{tpu_custom_call.1} parent=5 // pred_check_branch
        %980 = sbr.rel (%p978) target = $region88
      $region87: #{tpu_custom_call.1} parent=5 // pred_region
        %s981 = ssub.s32 %s20, 2
      $region88: #{tpu_custom_call.1} parent=5 // pred_fallthru
        _
    $region6: #{tpu_custom_call.1} parent=1 // loop_footer
      %s24 = sadd.s32 1, %s20
    $region7: #{tpu_custom_call.1} parent=1 // loop_footer_branch
      %19 = sbr.rel target = $region3
    $region8: #{tpu_custom_call.1} parent=1 // loop_exit
      _
    %982 = vsyncpa [#allocation5], 1
    %s983 = scalar_lea.sflag [#allocation5], 1
    %984 = vsyncpa %s983, 1
    %985 = vsyncpa [#allocation6], 1
    %s986 = scalar_lea.sflag [#allocation6], 1
    %987 = vsyncpa %s986, 1
    %988 = vsyncpa [#allocation8], 1

</llo_original>
